<compile_context>
chip_gen: v5e
topology: v5e:2x2
jax: 0.10.0
libtpu: 0.0.40
codegen_flags: <defaults>
</compile_context>

<pallas_src>
import functools
import re

import jax
import jax.numpy as jnp
from jax import lax
from jax.experimental import pallas as pl
from jax.experimental.pallas import tpu as pltpu

_LANE = 128
_MIB = 1024 * 1024


def _round_up(n, m):
    return (n + m - 1) // m * m


@functools.lru_cache(maxsize=None)
def _roll_matches_jnp_roll(backend: str) -> bool:
    """One-time probe of pltpu.roll's shift convention (vs jnp.roll).

    The tap/weight pairing below depends on the roll direction.  The probe is
    cached per backend and exception-safe: if it cannot run (AOT / interpret /
    non-TPU backend) we fall back to the jnp.roll convention.
    """
    del backend  # cache key only
    x = jnp.arange(8 * _LANE, dtype=jnp.float32).reshape(8, _LANE)

    def probe(x_ref, o_ref):
        o_ref[...] = pltpu.roll(x_ref[...], shift=1, axis=0)

    try:
        y = pl.pallas_call(
            probe, out_shape=jax.ShapeDtypeStruct((8, _LANE), jnp.float32))(x)
        return bool(jnp.array_equal(y, jnp.roll(x, 1, axis=0)))
    except Exception:  # pragma: no cover
        # TODO(synk): resolve pltpu.roll's convention statically.
        return True


@functools.lru_cache(maxsize=None)
def _tpu_generation_info():
    """Best-effort (vmem_capacity_bytes, tensorcores_per_chip, generation)."""
    vmem_cap = None
    n_cores = None
    gen = None
    try:
        info = pltpu.get_tpu_info()
        v = getattr(info, "vmem_capacity_bytes", None)
        if isinstance(v, int) and v > 0:
            vmem_cap = v
        for name in ("num_cores", "tensorcore_count", "cores_per_chip",
                     "num_tensorcores"):
            c = getattr(info, name, None)
            if isinstance(c, int) and c > 0:
                n_cores = c
                break
    except Exception:
        pass
    try:
        m = re.search(r"v(\d+)", jax.devices()[0].device_kind.lower())
        if m:
            gen = int(m.group(1))
    except Exception:
        pass
    if gen is None:
        gen = 6  # only affects perf heuristics, never correctness
        if vmem_cap is None:
            vmem_cap = 64 * _MIB          # conservative (v7x-sized) default
    if vmem_cap is None:
        vmem_cap = (128 if gen <= 6 else 64) * _MIB
    if n_cores is None:
        n_cores = 2 if gen >= 7 else 1
    return vmem_cap, n_cores, gen


def local_block_kernel(x_ref, w1_ref, b1_ref, w2_ref, b2_ref, w3_ref, b3_ref,
                       o_ref, *, seq_len, roll_like_jnp, split_taps):
    """One grid step: a (Bt*L, C) slab of fused batch elements."""
    m = x_ref.shape[0]
    # Row position inside its own sequence; hoisted, reused by all three layers.
    pos = lax.broadcasted_iota(jnp.int32, (m, 1), 0) % seq_len

    def dilated_conv(h, w_ref, b_ref, d):
        # h: (M, C) f32.  Output row r needs h[r-d], h[r], h[r+d], with zeros
        # outside its own sequence ('same' padding).  Shifts are sublane rolls
        # (XLU, native f32 layout); wrapped / cross-batch rows are zeroed by a
        # cheap (M, 1) mask which also stops taps leaking between the fused
        # batch elements inside one slab.
        lo_shift = d % m if roll_like_jnp else (-d) % m      # rolled[r] = h[r-d]
        hi_shift = (-d) % m if roll_like_jnp else d % m      # rolled[r] = h[r+d]
        keep_lo = (pos >= d).astype(h.dtype)
        keep_hi = (pos < seq_len - d).astype(h.dtype)
        lo = pltpu.roll(h, shift=lo_shift, axis=0) * keep_lo
        hi = pltpu.roll(h, shift=hi_shift, axis=0) * keep_hi
        c = h.shape[1]
        if split_taps:
            # v7x: the MRB accumulates in place, so three per-tap pushes cost no
            # extra VPU adds and avoid the (M, 3C) concat temporary under the
            # 64 MiB VMEM ceiling.
            acc = jnp.dot(lo.astype(jnp.bfloat16), w_ref[0 * c:1 * c, :],
                          preferred_element_type=jnp.float32)
            acc += jnp.dot(h.astype(jnp.bfloat16), w_ref[1 * c:2 * c, :],
                           preferred_element_type=jnp.float32)
            acc += jnp.dot(hi.astype(jnp.bfloat16), w_ref[2 * c:3 * c, :],
                           preferred_element_type=jnp.float32)
        else:
            # v5e/v6e: single MXU push per layer: (M, 3C) x (3C, Cout), bf16
            # operands, f32 accumulation; bias added in one broadcast f32 pass.
            taps = jnp.concatenate([lo, h, hi], axis=1).astype(jnp.bfloat16)
            acc = jnp.dot(taps, w_ref[...], preferred_element_type=jnp.float32)
        return acc + b_ref[...]

    x = x_ref[...].astype(jnp.float32)                       # (M, Cin_p)
    h = jnp.maximum(dilated_conv(x, w1_ref, b1_ref, 1), 0.0)
    h = jnp.maximum(dilated_conv(h, w2_ref, b2_ref, 2), 0.0)
    o_ref[...] = dilated_conv(h, w3_ref, b3_ref, 4).astype(o_ref.dtype)


def _pick_batch_tile(batch, seq_len, cin_p, cout_p, *, vmem_budget_bytes,
                     num_cores=1):
    """Largest batch tile under the per-generation VMEM budget, keeping the
    bf16 input block on its native (16,128) tiling and (on multi-core chips)
    keeping at least `num_cores` grid steps for the parallel axis."""
    cmax = max(cin_p, cout_p)

    def step_bytes(bt):
        m = bt * seq_len
        return (2 * m * cin_p * 2              # bf16 input block, double-buffered
                + 2 * m * cout_p * 4           # f32 output block, double-buffered
                + m * (3 * cmax * 4            # f32 concatenated taps
                       + 3 * cmax * 2          # bf16 MXU operand copy
                       + 3 * cmax * 4          # lo / h / hi shifted views
                       + 2 * cout_p * 4))      # f32 accumulator + ReLU temp

    # bf16 (m_tile, cin_p) blocks want m_tile % 16 == 0 (2 rows per sublane);
    # a block equal to the full array is always allowed.
    candidates = [bt for bt in range(1, batch + 1)
                  if batch % bt == 0
                  and ((bt * seq_len) % 16 == 0 or bt == batch)]
    if num_cores >= 2 and batch >= num_cores:
        multi = [bt for bt in candidates if batch // bt >= num_cores]
        if multi:
            candidates = multi                 # keep every TensorCore busy (v7x)
    fitting = [bt for bt in candidates if step_bytes(bt) <= vmem_budget_bytes]
    if fitting:
        if num_cores >= 2:
            even = [bt for bt in fitting if (batch // bt) % num_cores == 0]
            if even:
                fitting = even
        return max(fitting)
    # TODO(synk): L-tiling grid axis with a 7-row halo for seq_len too large to
    # fit a single batch element in VMEM; until then rely on the VMEM limit.
    return min(candidates)


def local_block(x, params):
    """x: (B, L, Cin) f32 -> (B, L, Cout) f32 (PyTorch LocalBlock forward)."""
    w1, b1, w2, b2, w3, b3 = params
    batch, seq_len, cin = x.shape
    cout = w1.shape[2]
    cin_p = _round_up(cin, _LANE)
    cout_p = _round_up(cout, _LANE)

    # ---- generation-aware sizing -------------------------------------------
    vmem_cap, n_cores, gen = _tpu_generation_info()
    if gen <= 6 and vmem_cap >= 96 * _MIB:        # v5e / v6e: 128 MiB VMEM
        vmem_budget, vmem_limit = 48 * _MIB, 96 * _MIB
    else:                                         # v7x / unknown: 64 MiB VMEM
        vmem_budget, vmem_limit = 20 * _MIB, 48 * _MIB
    split_taps = gen >= 7                         # MRB accumulates in place

    # ---- wrapper-side layout / dtype prep (one fused pad+cast HBM pass) -----
    # Channels padded to 128 multiples -> lane-dense loads/stores; zero weight
    # and bias padding keeps the padded output channels exactly zero.
    x2d = (jnp.zeros((batch * seq_len, cin_p), jnp.bfloat16)
           .at[:, :cin].set(x.reshape(batch * seq_len, cin).astype(jnp.bfloat16)))

    def prep_w(w, ci, ci_p):
        wp = jnp.zeros((3, ci_p, cout_p), jnp.float32).at[:, :ci, :cout].set(w)
        return wp.reshape(3 * ci_p, cout_p).astype(jnp.bfloat16)  # taps on K

    def prep_b(b):
        return jnp.zeros((1, cout_p), jnp.float32).at[:, :cout].set(
            b.reshape(1, -1))

    w1s = prep_w(w1, cin, cin_p)
    w2s = prep_w(w2, cout, cout_p)
    w3s = prep_w(w3, cout, cout_p)
    b1p, b2p, b3p = prep_b(b1), prep_b(b2), prep_b(b3)

    bt = _pick_batch_tile(batch, seq_len, cin_p, cout_p,
                          vmem_budget_bytes=vmem_budget, num_cores=n_cores)
    m_tile = bt * seq_len

    kernel = functools.partial(
        local_block_kernel, seq_len=seq_len,
        roll_like_jnp=_roll_matches_jnp_roll(jax.default_backend()),
        split_taps=split_taps)

    const = lambda shape: pl.BlockSpec(shape, lambda i: (0, 0))
    out2d = pl.pallas_call(
        kernel,
        out_shape=jax.ShapeDtypeStruct((batch * seq_len, cout_p), jnp.float32),
        grid_spec=pltpu.PrefetchScalarGridSpec(
            num_scalar_prefetch=0,
            grid=(batch // bt,),
            in_specs=[
                pl.BlockSpec((m_tile, cin_p), lambda i: (i, 0)),
                const((3 * cin_p, cout_p)), const((1, cout_p)),
                const((3 * cout_p, cout_p)), const((1, cout_p)),
                const((3 * cout_p, cout_p)), const((1, cout_p)),
            ],
            out_specs=pl.BlockSpec((m_tile, cout_p), lambda i: (i, 0)),
        ),
        compiler_params=pltpu.CompilerParams(
            dimension_semantics=("parallel",),
            vmem_limit_bytes=vmem_limit,
        ),
    )(x2d, w1s, b1p, w2s, b2p, w3s, b3p)

    return out2d.reshape(batch, seq_len, cout_p)[..., :cout]


def _init_params(key, in_channels, out_channels):
    """Deterministic synthetic weights. Kernel layout: (K=3, Cin, Cout)."""
    ks = jax.random.split(key, 6)
    s1 = 1.0 / (in_channels * 3) ** 0.5
    s2 = 1.0 / (out_channels * 3) ** 0.5
    w1 = jax.random.uniform(ks[0], (3, in_channels, out_channels),
                            jnp.float32, -s1, s1)
    b1 = jax.random.uniform(ks[1], (1, out_channels), jnp.float32, -s1, s1)
    w2 = jax.random.uniform(ks[2], (3, out_channels, out_channels),
                            jnp.float32, -s2, s2)
    b2 = jax.random.uniform(ks[3], (1, out_channels), jnp.float32, -s2, s2)
    w3 = jax.random.uniform(ks[4], (3, out_channels, out_channels),
                            jnp.float32, -s2, s2)
    b3 = jax.random.uniform(ks[5], (1, out_channels), jnp.float32, -s2, s2)
    return (w1, b1, w2, b2, w3, b3)


def _reference(x, params, operand_dtype=jnp.float32):
    """Pure-JAX reference (NCW dilated convs, like the PyTorch module).

    operand_dtype lets the reference be evaluated at the same bf16 operand
    precision the kernel feeds the MXU (accumulation stays f32).
    """
    w1, b1, w2, b2, w3, b3 = params

    def conv(h_ncw, w_kio, b, dil):
        w_oiw = jnp.transpose(w_kio, (2, 1, 0)).astype(operand_dtype)
        y = lax.conv_general_dilated(
            h_ncw.astype(operand_dtype), w_oiw, window_strides=(1,),
            padding=[(dil, dil)], rhs_dilation=(dil,),
            dimension_numbers=("NCW", "OIW", "NCW"),
            preferred_element_type=jnp.float32)
        return y + b.reshape(1, -1, 1)

    h = jnp.transpose(x, (0, 2, 1))                 # (B, Cin, L)
    h = jnp.maximum(conv(h, w1, b1, 1), 0.0)
    h = jnp.maximum(conv(h, w2, b2, 2), 0.0)
    h = conv(h, w3, b3, 4)
    return jnp.transpose(h, (0, 2, 1))              # (B, L, Cout)


if __name__ == "__main__":
    B, L, C_IN, C_OUT = 2, 16, 4, 8

    key = jax.random.PRNGKey(0)
    kx, kp = jax.random.split(key)
    x = jax.random.normal(kx, (B, L, C_IN), jnp.float32)
    params = _init_params(kp, C_IN, C_OUT)

    fwd = jax.jit(local_block)
    out = jax.block_until_ready(fwd(x, params))
    assert out.shape == (B, L, C_OUT)

    # Tight check vs a reference run at the same bf16 operand precision.
    ref_bf16 = _reference(x, params, operand_dtype=jnp.bfloat16)
    assert jnp.allclose(out, ref_bf16, rtol=1e-2, atol=1e-2), \
        "mismatch vs bf16-operand reference"
    # Loose sanity check vs the full-f32 PyTorch-equivalent reference.
    ref_f32 = _reference(x, params, operand_dtype=jnp.float32)
    assert jnp.allclose(out, ref_f32, rtol=1e-1, atol=8e-2), \
        "mismatch vs f32 reference"

    print("KERNEL_OK")
</pallas_src>

<mosaic_0001>
module attributes {stable_mosaic.version = 11 : i64} {
  func.func @local_block_kernel(%arg0: i32, %arg1: memref<32x128xbf16, #tpu.memory_space<vmem>>, %arg2: memref<384x128xbf16, #tpu.memory_space<vmem>>, %arg3: memref<1x128xf32, #tpu.memory_space<vmem>>, %arg4: memref<384x128xbf16, #tpu.memory_space<vmem>>, %arg5: memref<1x128xf32, #tpu.memory_space<vmem>>, %arg6: memref<384x128xbf16, #tpu.memory_space<vmem>>, %arg7: memref<1x128xf32, #tpu.memory_space<vmem>>, %arg8: memref<32x128xf32, #tpu.memory_space<vmem>>) attributes {dimension_semantics = [#tpu.dimension_semantics<parallel>], iteration_bounds = array<i64: 1>, scalar_prefetch = 0 : i64, scratch_operands = 0 : i64, tpu.core_type = #tpu.core_type<tc>, window_params = [{transform_indices = @transform_0, window_bounds = array<i64: 32, 128>}, {pipeline_mode = #tpu.pipeline_mode<synchronous>, transform_indices = @transform_1, window_bounds = array<i64: 384, 128>}, {pipeline_mode = #tpu.pipeline_mode<synchronous>, transform_indices = @transform_2, window_bounds = array<i64: 1, 128>}, {pipeline_mode = #tpu.pipeline_mode<synchronous>, transform_indices = @transform_3, window_bounds = array<i64: 384, 128>}, {pipeline_mode = #tpu.pipeline_mode<synchronous>, transform_indices = @transform_4, window_bounds = array<i64: 1, 128>}, {pipeline_mode = #tpu.pipeline_mode<synchronous>, transform_indices = @transform_5, window_bounds = array<i64: 384, 128>}, {pipeline_mode = #tpu.pipeline_mode<synchronous>, transform_indices = @transform_6, window_bounds = array<i64: 1, 128>}, {transform_indices = @transform_7, window_bounds = array<i64: 32, 128>}]} {
    %0 = tpu.iota {dimensions = array<i32: 0>} : vector<32x1xi32>
    %c16_i32 = arith.constant 16 : i32
    %c0_i32 = arith.constant 0 : i32
    %1 = arith.cmpi eq, %c16_i32, %c0_i32 : i32
    %c1_i32 = arith.constant 1 : i32
    %2 = arith.select %1, %c1_i32, %c16_i32 : i32
    %3 = vector.broadcast %2 : i32 to vector<32x1xi32>
    %4 = arith.remsi %0, %3 : vector<32x1xi32>
    %c0_i32_0 = arith.constant 0 : i32
    %5 = vector.broadcast %c0_i32_0 : i32 to vector<32x1xi32>
    %6 = arith.cmpi ne, %4, %5 : vector<32x1xi32>
    %c0_i32_1 = arith.constant 0 : i32
    %7 = vector.broadcast %c0_i32_1 : i32 to vector<32x1xi32>
    %8 = arith.cmpi slt, %4, %7 : vector<32x1xi32>
    %c0_i32_2 = arith.constant 0 : i32
    %9 = arith.cmpi slt, %2, %c0_i32_2 : i32
    %10 = vector.broadcast %9 : i1 to vector<32x1xi1>
    %11 = vector.broadcast %10 : vector<32x1xi1> to vector<32x1xi1>
    %12 = arith.xori %8, %11 : vector<32x1xi1>
    %13 = arith.andi %12, %6 : vector<32x1xi1>
    %14 = vector.broadcast %2 : i32 to vector<32x1xi32>
    %15 = arith.addi %4, %14 : vector<32x1xi32>
    %16 = arith.select %13, %15, %4 : vector<32x1xi1>, vector<32x1xi32>
    %c0 = arith.constant 0 : index
    %c0_3 = arith.constant 0 : index
    %17 = vector.load %arg1[%c0, %c0_3] : memref<32x128xbf16, #tpu.memory_space<vmem>>, vector<32x128xbf16>
    %18 = arith.extf %17 : vector<32x128xbf16> to vector<32x128xf32>
    %c1_i32_4 = arith.constant 1 : i32
    %19 = vector.broadcast %c1_i32_4 : i32 to vector<32x1xi32>
    %20 = arith.cmpi sge, %16, %19 : vector<32x1xi32>
    %21 = arith.extui %20 : vector<32x1xi1> to vector<32x1xi32>
    %22 = arith.sitofp %21 : vector<32x1xi32> to vector<32x1xf32>
    %c15_i32 = arith.constant 15 : i32
    %23 = vector.broadcast %c15_i32 : i32 to vector<32x1xi32>
    %24 = arith.cmpi slt, %16, %23 : vector<32x1xi32>
    %25 = arith.extui %24 : vector<32x1xi1> to vector<32x1xi32>
    %26 = arith.sitofp %25 : vector<32x1xi32> to vector<32x1xf32>
    %c1_i32_5 = arith.constant 1 : i32
    %27 = tpu.dynamic_rotate %18 by %c1_i32_5 dim 0 : vector<32x128xf32>, i32 -> vector<32x128xf32>
    %28 = vector.broadcast %22 : vector<32x1xf32> to vector<32x128xf32>
    %29 = arith.mulf %27, %28 : vector<32x128xf32>
    %c31_i32 = arith.constant 31 : i32
    %30 = tpu.dynamic_rotate %18 by %c31_i32 dim 0 : vector<32x128xf32>, i32 -> vector<32x128xf32>
    %31 = vector.broadcast %26 : vector<32x1xf32> to vector<32x128xf32>
    %32 = arith.mulf %30, %31 : vector<32x128xf32>
    %33 = tpu.concatenate %29, %18, %32 in 1 : vector<32x128xf32>, vector<32x128xf32>, vector<32x128xf32> -> vector<32x384xf32>
    %34 = arith.truncf %33 : vector<32x384xf32> to vector<32x384xbf16>
    %c0_6 = arith.constant 0 : index
    %c0_7 = arith.constant 0 : index
    %35 = vector.load %arg2[%c0_6, %c0_7] : memref<384x128xbf16, #tpu.memory_space<vmem>>, vector<384x128xbf16>
    %cst = arith.constant dense<0.000000e+00> : vector<32x128xf32>
    %36 = tpu.matmul %34, %35, %cst {dimension_numbers = #tpu.dot_dimension_numbers<[1], [0], [0], [1], [0, 0, 1, 1], [], []>} : vector<32x384xbf16>, vector<384x128xbf16>, vector<32x128xf32> -> vector<32x128xf32>
    %c0_8 = arith.constant 0 : index
    %c0_9 = arith.constant 0 : index
    %37 = vector.load %arg3[%c0_8, %c0_9] : memref<1x128xf32, #tpu.memory_space<vmem>>, vector<1x128xf32>
    %38 = vector.broadcast %37 : vector<1x128xf32> to vector<32x128xf32>
    %39 = arith.addf %36, %38 : vector<32x128xf32>
    %cst_10 = arith.constant 0.000000e+00 : f32
    %40 = vector.broadcast %cst_10 : f32 to vector<32x128xf32>
    %41 = arith.maximumf %39, %40 : vector<32x128xf32>
    %c2_i32 = arith.constant 2 : i32
    %42 = vector.broadcast %c2_i32 : i32 to vector<32x1xi32>
    %43 = arith.cmpi sge, %16, %42 : vector<32x1xi32>
    %44 = arith.extui %43 : vector<32x1xi1> to vector<32x1xi32>
    %45 = arith.sitofp %44 : vector<32x1xi32> to vector<32x1xf32>
    %c14_i32 = arith.constant 14 : i32
    %46 = vector.broadcast %c14_i32 : i32 to vector<32x1xi32>
    %47 = arith.cmpi slt, %16, %46 : vector<32x1xi32>
    %48 = arith.extui %47 : vector<32x1xi1> to vector<32x1xi32>
    %49 = arith.sitofp %48 : vector<32x1xi32> to vector<32x1xf32>
    %c2_i32_11 = arith.constant 2 : i32
    %50 = tpu.dynamic_rotate %41 by %c2_i32_11 dim 0 : vector<32x128xf32>, i32 -> vector<32x128xf32>
    %51 = vector.broadcast %45 : vector<32x1xf32> to vector<32x128xf32>
    %52 = arith.mulf %50, %51 : vector<32x128xf32>
    %c30_i32 = arith.constant 30 : i32
    %53 = tpu.dynamic_rotate %41 by %c30_i32 dim 0 : vector<32x128xf32>, i32 -> vector<32x128xf32>
    %54 = vector.broadcast %49 : vector<32x1xf32> to vector<32x128xf32>
    %55 = arith.mulf %53, %54 : vector<32x128xf32>
    %56 = tpu.concatenate %52, %41, %55 in 1 : vector<32x128xf32>, vector<32x128xf32>, vector<32x128xf32> -> vector<32x384xf32>
    %57 = arith.truncf %56 : vector<32x384xf32> to vector<32x384xbf16>
    %c0_12 = arith.constant 0 : index
    %c0_13 = arith.constant 0 : index
    %58 = vector.load %arg4[%c0_12, %c0_13] : memref<384x128xbf16, #tpu.memory_space<vmem>>, vector<384x128xbf16>
    %cst_14 = arith.constant dense<0.000000e+00> : vector<32x128xf32>
    %59 = tpu.matmul %57, %58, %cst_14 {dimension_numbers = #tpu.dot_dimension_numbers<[1], [0], [0], [1], [0, 0, 1, 1], [], []>} : vector<32x384xbf16>, vector<384x128xbf16>, vector<32x128xf32> -> vector<32x128xf32>
    %c0_15 = arith.constant 0 : index
    %c0_16 = arith.constant 0 : index
    %60 = vector.load %arg5[%c0_15, %c0_16] : memref<1x128xf32, #tpu.memory_space<vmem>>, vector<1x128xf32>
    %61 = vector.broadcast %60 : vector<1x128xf32> to vector<32x128xf32>
    %62 = arith.addf %59, %61 : vector<32x128xf32>
    %cst_17 = arith.constant 0.000000e+00 : f32
    %63 = vector.broadcast %cst_17 : f32 to vector<32x128xf32>
    %64 = arith.maximumf %62, %63 : vector<32x128xf32>
    %c4_i32 = arith.constant 4 : i32
    %65 = vector.broadcast %c4_i32 : i32 to vector<32x1xi32>
    %66 = arith.cmpi sge, %16, %65 : vector<32x1xi32>
    %67 = arith.extui %66 : vector<32x1xi1> to vector<32x1xi32>
    %68 = arith.sitofp %67 : vector<32x1xi32> to vector<32x1xf32>
    %c12_i32 = arith.constant 12 : i32
    %69 = vector.broadcast %c12_i32 : i32 to vector<32x1xi32>
    %70 = arith.cmpi slt, %16, %69 : vector<32x1xi32>
    %71 = arith.extui %70 : vector<32x1xi1> to vector<32x1xi32>
    %72 = arith.sitofp %71 : vector<32x1xi32> to vector<32x1xf32>
    %c4_i32_18 = arith.constant 4 : i32
    %73 = tpu.dynamic_rotate %64 by %c4_i32_18 dim 0 : vector<32x128xf32>, i32 -> vector<32x128xf32>
    %74 = vector.broadcast %68 : vector<32x1xf32> to vector<32x128xf32>
    %75 = arith.mulf %73, %74 : vector<32x128xf32>
    %c28_i32 = arith.constant 28 : i32
    %76 = tpu.dynamic_rotate %64 by %c28_i32 dim 0 : vector<32x128xf32>, i32 -> vector<32x128xf32>
    %77 = vector.broadcast %72 : vector<32x1xf32> to vector<32x128xf32>
    %78 = arith.mulf %76, %77 : vector<32x128xf32>
    %79 = tpu.concatenate %75, %64, %78 in 1 : vector<32x128xf32>, vector<32x128xf32>, vector<32x128xf32> -> vector<32x384xf32>
    %80 = arith.truncf %79 : vector<32x384xf32> to vector<32x384xbf16>
    %c0_19 = arith.constant 0 : index
    %c0_20 = arith.constant 0 : index
    %81 = vector.load %arg6[%c0_19, %c0_20] : memref<384x128xbf16, #tpu.memory_space<vmem>>, vector<384x128xbf16>
    %cst_21 = arith.constant dense<0.000000e+00> : vector<32x128xf32>
    %82 = tpu.matmul %80, %81, %cst_21 {dimension_numbers = #tpu.dot_dimension_numbers<[1], [0], [0], [1], [0, 0, 1, 1], [], []>} : vector<32x384xbf16>, vector<384x128xbf16>, vector<32x128xf32> -> vector<32x128xf32>
    %c0_22 = arith.constant 0 : index
    %c0_23 = arith.constant 0 : index
    %83 = vector.load %arg7[%c0_22, %c0_23] : memref<1x128xf32, #tpu.memory_space<vmem>>, vector<1x128xf32>
    %84 = vector.broadcast %83 : vector<1x128xf32> to vector<32x128xf32>
    %85 = arith.addf %82, %84 : vector<32x128xf32>
    %c0_24 = arith.constant 0 : index
    %c0_25 = arith.constant 0 : index
    %86 = vector.load %arg8[%c0_24, %c0_25] : memref<32x128xf32, #tpu.memory_space<vmem>>, vector<32x128xf32>
    tpu.vector_store %arg8[%c0_24, %c0_25], %85 {strides = array<i32>} : memref<32x128xf32, #tpu.memory_space<vmem>>, vector<32x128xf32>,
    return
  }
  func.func @transform_0(%arg0: i32) -> (i32, i32) {
    %c0_i32 = arith.constant 0 : i32
    %c0_i32_0 = arith.constant 0 : i32
    return %arg0, %c0_i32 : i32, i32
  }
  func.func @transform_1(%arg0: i32) -> (i32, i32) {
    %c0_i32 = arith.constant 0 : i32
    %c0_i32_0 = arith.constant 0 : i32
    %c0_i32_1 = arith.constant 0 : i32
    return %c0_i32, %c0_i32_0 : i32, i32
  }
  func.func @transform_2(%arg0: i32) -> (i32, i32) {
    %c0_i32 = arith.constant 0 : i32
    %c0_i32_0 = arith.constant 0 : i32
    %c0_i32_1 = arith.constant 0 : i32
    return %c0_i32, %c0_i32_0 : i32, i32
  }
  func.func @transform_3(%arg0: i32) -> (i32, i32) {
    %c0_i32 = arith.constant 0 : i32
    %c0_i32_0 = arith.constant 0 : i32
    %c0_i32_1 = arith.constant 0 : i32
    return %c0_i32, %c0_i32_0 : i32, i32
  }
  func.func @transform_4(%arg0: i32) -> (i32, i32) {
    %c0_i32 = arith.constant 0 : i32
    %c0_i32_0 = arith.constant 0 : i32
    %c0_i32_1 = arith.constant 0 : i32
    return %c0_i32, %c0_i32_0 : i32, i32
  }
  func.func @transform_5(%arg0: i32) -> (i32, i32) {
    %c0_i32 = arith.constant 0 : i32
    %c0_i32_0 = arith.constant 0 : i32
    %c0_i32_1 = arith.constant 0 : i32
    return %c0_i32, %c0_i32_0 : i32, i32
  }
  func.func @transform_6(%arg0: i32) -> (i32, i32) {
    %c0_i32 = arith.constant 0 : i32
    %c0_i32_0 = arith.constant 0 : i32
    %c0_i32_1 = arith.constant 0 : i32
    return %c0_i32, %c0_i32_0 : i32, i32
  }
  func.func @transform_7(%arg0: i32) -> (i32, i32) {
    %c0_i32 = arith.constant 0 : i32
    %c0_i32_0 = arith.constant 0 : i32
    return %arg0, %c0_i32 : i32, i32
  }
}

</mosaic_0001>

<llo_original>
// kernel: local_block.1
$region0: #{local_block.1}
  #allocation0 [shape = 'u32[]', space=smem, size = 0x4, offset = 0x4, fixed_abs, tag = 'smem constant byte address 0x4 - core index']
  #allocation1 [shape = 'u32[72,128]{1,0:T(1,128)}', space=vmem, size = 0x9000, scoped, tag = 'internal scratch']
  %s0 = inlined_call_operand.vmem [shape: bf16[32,128], index: 0, kind: input, shape index: {}]
  %s1 = inlined_call_operand.vmem [shape: bf16[384,128], index: 1, kind: input, shape index: {}]
  %s2 = inlined_call_operand.vmem [shape: f32[1,128], index: 2, kind: input, shape index: {}]
  %s3 = inlined_call_operand.vmem [shape: bf16[384,128], index: 3, kind: input, shape index: {}]
  %s4 = inlined_call_operand.vmem [shape: f32[1,128], index: 4, kind: input, shape index: {}]
  %s5 = inlined_call_operand.vmem [shape: bf16[384,128], index: 5, kind: input, shape index: {}]
  %s6 = inlined_call_operand.vmem [shape: f32[1,128], index: 6, kind: input, shape index: {}]
  %s7 = inlined_call_operand.vmem [shape: f32[32,128], index: 7, kind: output, shape index: {}]
  %s8 = sld [smem:[#allocation0]]
  $region38: #{local_block.1} parent=0
    _
  %s10 = ssub.s32 1, %s8
  %s11 = scalar_select 0, %s10, %s8
  // Predicated region
  $region2: #{local_block.1} parent=0 // pred_check
    _
  $region3: #{local_block.1} parent=0 // pred_check_branch
    %13 = sbr.rel (0) target = $region5
  $region4: #{local_block.1} parent=0 // pred_region
    _
  $region5: #{local_block.1} parent=0 // pred_fallthru
    _
  // Predicated region
  $region6: #{local_block.1} parent=0 // pred_check
    _
  $region7: #{local_block.1} parent=0 // pred_check_branch
    %15 = sbr.rel (0) target = $region9
  $region8: #{local_block.1} parent=0 // pred_region
    _
  $region9: #{local_block.1} parent=0 // pred_fallthru
    _
  // Predicated region
  $region10: #{local_block.1} parent=0 // pred_check
    _
  $region11: #{local_block.1} parent=0 // pred_check_branch
    %17 = sbr.rel (0) target = $region13
  $region12: #{local_block.1} parent=0 // pred_region
    _
  $region13: #{local_block.1} parent=0 // pred_fallthru
    _
  // Predicated region
  $region14: #{local_block.1} parent=0 // pred_check
    _
  $region15: #{local_block.1} parent=0 // pred_check_branch
    %19 = sbr.rel (0) target = $region17
  $region16: #{local_block.1} parent=0 // pred_region
    _
  $region17: #{local_block.1} parent=0 // pred_fallthru
    _
  // Predicated region
  $region18: #{local_block.1} parent=0 // pred_check
    _
  $region19: #{local_block.1} parent=0 // pred_check_branch
    %21 = sbr.rel (0) target = $region21
  $region20: #{local_block.1} parent=0 // pred_region
    _
  $region21: #{local_block.1} parent=0 // pred_fallthru
    _
  // Predicated region
  $region22: #{local_block.1} parent=0 // pred_check
    _
  $region23: #{local_block.1} parent=0 // pred_check_branch
    %23 = sbr.rel (0) target = $region25
  $region24: #{local_block.1} parent=0 // pred_region
    _
  $region25: #{local_block.1} parent=0 // pred_fallthru
    _
  // Predicated region
  $region26: #{local_block.1} parent=0 // pred_check
    _
  $region27: #{local_block.1} parent=0 // pred_check_branch
    %25 = sbr.rel (0) target = $region29
  $region28: #{local_block.1} parent=0 // pred_region
    _
  $region29: #{local_block.1} parent=0 // pred_fallthru
    _
  %v26 = vlaneseq
  %v27 = vshrl.u32 %v26, 7
  %v28 = vadd.s32 %v27, 8
  %v29 = vadd.s32 %v27, 16
  %v30 = vadd.s32 %v27, 24
  %vm31 = vcmp.lt.s32.totalorder %v27, 0
  %v32 = vsub.s32 0, %v27
  %v33 = vsel %vm31, %v32, %v27
  %v34 = vshrl.u32 %v33, 4
  %v35 = vand.u32 %v33, 15
  %v36 = vsub.s32 0, %v35
  %v37 = vsel %vm31, %v36, %v35
  %vm38 = vcmp.lt.s32.totalorder %v28, 0
  %v39 = vsub.s32 0, %v28
  %v40 = vsel %vm38, %v39, %v28
  %v41 = vshrl.u32 %v40, 4
  %v42 = vand.u32 %v40, 15
  %v43 = vsub.s32 0, %v42
  %v44 = vsel %vm38, %v43, %v42
  %vm45 = vcmp.lt.s32.totalorder %v29, 0
  %v46 = vsub.s32 0, %v29
  %v47 = vsel %vm45, %v46, %v29
  %v48 = vshrl.u32 %v47, 4
  %v49 = vand.u32 %v47, 15
  %v50 = vsub.s32 0, %v49
  %v51 = vsel %vm45, %v50, %v49
  %vm52 = vcmp.lt.s32.totalorder %v30, 0
  %v53 = vsub.s32 0, %v30
  %v54 = vsel %vm52, %v53, %v30
  %v55 = vshrl.u32 %v54, 4
  %v56 = vand.u32 %v54, 15
  %v57 = vsub.s32 0, %v56
  %v58 = vsel %vm52, %v57, %v56
  %vm59 = vcmp.ne.s32.totalorder %v37, 0
  %vm60 = vcmp.ne.s32.totalorder %v44, 0
  %vm61 = vcmp.ne.s32.totalorder %v51, 0
  %vm62 = vcmp.ne.s32.totalorder %v58, 0
  %vm63 = vcmp.lt.s32.totalorder %v37, 0
  %vm64 = vcmp.lt.s32.totalorder %v44, 0
  %vm65 = vcmp.lt.s32.totalorder %v51, 0
  %vm66 = vcmp.lt.s32.totalorder %v58, 0
  %vm67 = vmand %vm63, %vm59
  %vm68 = vmand %vm64, %vm60
  %vm69 = vmand %vm65, %vm61
  %vm70 = vmand %vm66, %vm62
  %v71 = vadd.s32 %v37, 16
  %v72 = vadd.s32 %v44, 16
  %v73 = vadd.s32 %v51, 16
  %v74 = vadd.s32 %v58, 16
  %v75 = vsel %vm67, %v71, %v37
  %v76 = vsel %vm68, %v72, %v44
  %v77 = vsel %vm69, %v73, %v51
  %v78 = vsel %vm70, %v74, %v58
  %v79 = vld [vmem:[%s0] sm:$0xf]
  %v80 = vld [vmem:[%s0 + $0x4] sm:$0xf]
  %v81 = vld [vmem:[%s0 + $0x8] sm:$0xf]
  %v82 = vld [vmem:[%s0 + $0xc] sm:$0xf]
  %v83 = vunpack.c.l.bf16 %v79
  %v84 = vunpack.c.l.bf16 %v80
  %v85 = vunpack.c.l.bf16 %v81
  %v86 = vunpack.c.l.bf16 %v82
  %vm87 = vcmp.ge.s32.totalorder %v75, 1
  %vm88 = vcmp.ge.s32.totalorder %v76, 1
  %vm89 = vcmp.ge.s32.totalorder %v77, 1
  %vm90 = vcmp.ge.s32.totalorder %v78, 1
  %v91 = vsel %vm87, 1, 0
  %v92 = vsel %vm88, 1, 0
  %v93 = vsel %vm89, 1, 0
  %v94 = vsel %vm90, 1, 0
  %v95 = vcvt.s32.f32 %v91
  %v96 = vcvt.s32.f32 %v92
  %v97 = vcvt.s32.f32 %v93
  %v98 = vcvt.s32.f32 %v94
  %vm99 = vcmp.lt.s32.totalorder %v75, 15
  %vm100 = vcmp.lt.s32.totalorder %v76, 15
  %vm101 = vcmp.lt.s32.totalorder %v77, 15
  %vm102 = vcmp.lt.s32.totalorder %v78, 15
  %v103 = vsel %vm99, 1, 0
  %v104 = vsel %vm100, 1, 0
  %v105 = vsel %vm101, 1, 0
  %v106 = vsel %vm102, 1, 0
  %v107 = vcvt.s32.f32 %v103
  %v108 = vcvt.s32.f32 %v104
  %v109 = vcvt.s32.f32 %v105
  %v110 = vcvt.s32.f32 %v106
  %v111 = vrot.slane %v83, 7
  %v112 = vrot.slane %v84, 7
  %v113 = vrot.slane %v85, 7
  %v114 = vrot.slane %v86, 7
  %vm115 = vcmp.lt.s32.totalorder %v27, 1
  %v116 = vsel %vm115, %v113, %v114
  %v117 = vsel %vm115, %v112, %v113
  %v118 = vsel %vm115, %v111, %v112
  %v119 = vsel %vm115, %v114, %v111
  %v120 = vmul.f32 %v119, %v95
  %v121 = vmul.f32 %v118, %v96
  %v122 = vmul.f32 %v117, %v97
  %v123 = vmul.f32 %v116, %v98
  %v124 = vrot.slane %v83, 1
  %v125 = vrot.slane %v84, 1
  %v126 = vrot.slane %v85, 1
  %v127 = vrot.slane %v86, 1
  %vm128 = vcmp.lt.s32.totalorder %v27, 7
  %v129 = vsel %vm128, %v126, %v127
  %v130 = vsel %vm128, %v125, %v126
  %v131 = vsel %vm128, %v124, %v125
  %v132 = vsel %vm128, %v127, %v124
  %v133 = vmul.f32 %v131, %v107
  %v134 = vmul.f32 %v130, %v108
  %v135 = vmul.f32 %v129, %v109
  %v136 = vmul.f32 %v132, %v110
  %v137 = vpack.c.bf16 %v121, %v120
  %v138 = vpack.c.bf16 %v84, %v83
  %v139 = vpack.c.bf16 %v134, %v133
  %v140 = vpack.c.bf16 %v123, %v122
  %v141 = vpack.c.bf16 %v86, %v85
  %v142 = vpack.c.bf16 %v136, %v135
  %v143 = vld [vmem:[%s1] sm:$0xf]
  %v144 = vld [vmem:[%s1 + $0x4] sm:$0xf]
  %v145 = vld [vmem:[%s1 + $0x8] sm:$0xf]
  %v146 = vld [vmem:[%s1 + $0xc] sm:$0xf]
  %v147 = vld [vmem:[%s1 + $0x10] sm:$0xf]
  %v148 = vld [vmem:[%s1 + $0x14] sm:$0xf]
  %v149 = vld [vmem:[%s1 + $0x18] sm:$0xf]
  %v150 = vld [vmem:[%s1 + $0x1c] sm:$0xf]
  %v151 = vld [vmem:[%s1 + $0x20] sm:$0xf]
  %v152 = vld [vmem:[%s1 + $0x24] sm:$0xf]
  %v153 = vld [vmem:[%s1 + $0x28] sm:$0xf]
  %v154 = vld [vmem:[%s1 + $0x2c] sm:$0xf]
  %v155 = vld [vmem:[%s1 + $0x30] sm:$0xf]
  %v156 = vld [vmem:[%s1 + $0x34] sm:$0xf]
  %v157 = vld [vmem:[%s1 + $0x38] sm:$0xf]
  %v158 = vld [vmem:[%s1 + $0x3c] sm:$0xf]
  %v159 = vld [vmem:[%s1 + $0x40] sm:$0xf]
  %v160 = vld [vmem:[%s1 + $0x44] sm:$0xf]
  %v161 = vld [vmem:[%s1 + $0x48] sm:$0xf]
  %v162 = vld [vmem:[%s1 + $0x4c] sm:$0xf]
  %v163 = vld [vmem:[%s1 + $0x50] sm:$0xf]
  %v164 = vld [vmem:[%s1 + $0x54] sm:$0xf]
  %v165 = vld [vmem:[%s1 + $0x58] sm:$0xf]
  %v166 = vld [vmem:[%s1 + $0x5c] sm:$0xf]
  %v167 = vld [vmem:[%s1 + $0x60] sm:$0xf]
  %v168 = vld [vmem:[%s1 + $0x64] sm:$0xf]
  %v169 = vld [vmem:[%s1 + $0x68] sm:$0xf]
  %v170 = vld [vmem:[%s1 + $0x6c] sm:$0xf]
  %v171 = vld [vmem:[%s1 + $0x70] sm:$0xf]
  %v172 = vld [vmem:[%s1 + $0x74] sm:$0xf]
  %v173 = vld [vmem:[%s1 + $0x78] sm:$0xf]
  %v174 = vld [vmem:[%s1 + $0x7c] sm:$0xf]
  %v175 = vld [vmem:[%s1 + $0x80] sm:$0xf]
  %v176 = vld [vmem:[%s1 + $0x84] sm:$0xf]
  %v177 = vld [vmem:[%s1 + $0x88] sm:$0xf]
  %v178 = vld [vmem:[%s1 + $0x8c] sm:$0xf]
  %v179 = vld [vmem:[%s1 + $0x90] sm:$0xf]
  %v180 = vld [vmem:[%s1 + $0x94] sm:$0xf]
  %v181 = vld [vmem:[%s1 + $0x98] sm:$0xf]
  %v182 = vld [vmem:[%s1 + $0x9c] sm:$0xf]
  %v183 = vld [vmem:[%s1 + $0xa0] sm:$0xf]
  %v184 = vld [vmem:[%s1 + $0xa4] sm:$0xf]
  %v185 = vld [vmem:[%s1 + $0xa8] sm:$0xf]
  %v186 = vld [vmem:[%s1 + $0xac] sm:$0xf]
  %v187 = vld [vmem:[%s1 + $0xb0] sm:$0xf]
  %v188 = vld [vmem:[%s1 + $0xb4] sm:$0xf]
  %v189 = vld [vmem:[%s1 + $0xb8] sm:$0xf]
  %v190 = vld [vmem:[%s1 + $0xbc] sm:$0xf]
  %v191 = vld [vmem:[%s2] sm:$0x1]
  %v193 = vperm.slane %v191, 0
  %v243 = vunpack.c.l.b16 %v143
  %v244 = vunpack.c.l.b16 %v144
  %v245 = vunpack.c.l.b16 %v145
  %v246 = vunpack.c.l.b16 %v146
  %v247 = vunpack.c.l.b16 %v147
  %v248 = vunpack.c.l.b16 %v148
  %v249 = vunpack.c.l.b16 %v149
  %v250 = vunpack.c.l.b16 %v150
  %v251 = vunpack.c.l.b16 %v151
  %v252 = vunpack.c.l.b16 %v152
  %v253 = vunpack.c.l.b16 %v153
  %v254 = vunpack.c.l.b16 %v154
  %v255 = vunpack.c.l.b16 %v155
  %v256 = vunpack.c.l.b16 %v156
  %v257 = vunpack.c.l.b16 %v157
  %v258 = vunpack.c.l.b16 %v158
  %v259 = vunpack.c.l.b16 %v159
  %v260 = vunpack.c.l.b16 %v160
  %v261 = vunpack.c.l.b16 %v161
  %v262 = vunpack.c.l.b16 %v162
  %v263 = vunpack.c.l.b16 %v163
  %v264 = vunpack.c.l.b16 %v164
  %v265 = vunpack.c.l.b16 %v165
  %v266 = vunpack.c.l.b16 %v166
  %v267 = vunpack.c.l.b16 %v167
  %v268 = vunpack.c.l.b16 %v168
  %v269 = vunpack.c.l.b16 %v169
  %v270 = vunpack.c.l.b16 %v170
  %v271 = vunpack.c.l.b16 %v171
  %v272 = vunpack.c.l.b16 %v172
  %v273 = vunpack.c.l.b16 %v173
  %v274 = vunpack.c.l.b16 %v174
  %v275 = vunpack.c.l.b16 %v175
  %v276 = vunpack.c.l.b16 %v176
  %v277 = vunpack.c.l.b16 %v177
  %v278 = vunpack.c.l.b16 %v178
  %v279 = vunpack.c.l.b16 %v179
  %v280 = vunpack.c.l.b16 %v180
  %v281 = vunpack.c.l.b16 %v181
  %v282 = vunpack.c.l.b16 %v182
  %v283 = vunpack.c.l.b16 %v183
  %v284 = vunpack.c.l.b16 %v184
  %v285 = vunpack.c.l.b16 %v185
  %v286 = vunpack.c.l.b16 %v186
  %v287 = vunpack.c.l.b16 %v187
  %v288 = vunpack.c.l.b16 %v188
  %v289 = vunpack.c.l.b16 %v189
  %v290 = vunpack.c.l.b16 %v190
  %v291 = vpack.c.b16 %v244, %v243
  %v292 = vpack.c.b16 %v246, %v245
  %v293 = vpack.c.b16 %v248, %v247
  %v294 = vpack.c.b16 %v250, %v249
  %v295 = vpack.c.b16 %v252, %v251
  %v296 = vpack.c.b16 %v254, %v253
  %v297 = vpack.c.b16 %v256, %v255
  %v298 = vpack.c.b16 %v258, %v257
  %v299 = vpack.c.b16 %v260, %v259
  %v300 = vpack.c.b16 %v262, %v261
  %v301 = vpack.c.b16 %v264, %v263
  %v302 = vpack.c.b16 %v266, %v265
  %v303 = vpack.c.b16 %v268, %v267
  %v304 = vpack.c.b16 %v270, %v269
  %v305 = vpack.c.b16 %v272, %v271
  %v306 = vpack.c.b16 %v274, %v273
  %v307 = vpack.c.b16 %v276, %v275
  %v308 = vpack.c.b16 %v278, %v277
  %v309 = vpack.c.b16 %v280, %v279
  %v310 = vpack.c.b16 %v282, %v281
  %v311 = vpack.c.b16 %v284, %v283
  %v312 = vpack.c.b16 %v286, %v285
  %v313 = vpack.c.b16 %v288, %v287
  %v314 = vpack.c.b16 %v290, %v289
  %339 = vmatpush.bf16.msra.mxu0 %v298
  %340 = vmatpush.bf16.msra.mxu0 %v297
  %341 = vmatpush.bf16.msra.mxu0 %v296
  %342 = vmatpush.bf16.msra.mxu0 %v295
  %343 = vmatpush.bf16.msra.mxu0 %v294
  %344 = vmatpush.bf16.msra.mxu0 %v293
  %345 = vmatpush.bf16.msra.mxu0 %v292
  %346 = vmatpush.bf16.msra.mxu0 %v291
  %347 = vmatmul.bf16.gmra.mxu0 %v137
  %v348 = vpop.f32.mrf.mxu0
  %v349 = vadd.f32 %v193, %v348
  %v350 = vpop.f32.mrf.mxu0
  %v351 = vadd.f32 %v193, %v350
  %352 = vmatmul.bf16.gmra.mxu0 %v140
  %v353 = vpop.f32.mrf.mxu0
  %v354 = vadd.f32 %v193, %v353
  %v355 = vpop.f32.mrf.mxu0
  %v356 = vadd.f32 %v193, %v355
  %357 = vdwg.mxu0
  %358 = vmatpush.bf16.msra.mxu0 %v306
  %359 = vmatpush.bf16.msra.mxu0 %v305
  %360 = vmatpush.bf16.msra.mxu0 %v304
  %361 = vmatpush.bf16.msra.mxu0 %v303
  %362 = vmatpush.bf16.msra.mxu0 %v302
  %363 = vmatpush.bf16.msra.mxu0 %v301
  %364 = vmatpush.bf16.msra.mxu0 %v300
  %365 = vmatpush.bf16.msra.mxu0 %v299
  %366 = vmatmul.bf16.gmra.mxu0 %v138
  %v367 = vpop.f32.mrf.mxu0
  %v368 = vadd.f32 %v349, %v367
  %v369 = vpop.f32.mrf.mxu0
  %v370 = vadd.f32 %v351, %v369
  %371 = vmatmul.bf16.gmra.mxu0 %v141
  %v372 = vpop.f32.mrf.mxu0
  %v373 = vadd.f32 %v354, %v372
  %v374 = vpop.f32.mrf.mxu0
  %v375 = vadd.f32 %v356, %v374
  %376 = vdwg.mxu0
  %377 = vmatpush.bf16.msra.mxu0 %v314
  %378 = vmatpush.bf16.msra.mxu0 %v313
  %379 = vmatpush.bf16.msra.mxu0 %v312
  %380 = vmatpush.bf16.msra.mxu0 %v311
  %381 = vmatpush.bf16.msra.mxu0 %v310
  %382 = vmatpush.bf16.msra.mxu0 %v309
  %383 = vmatpush.bf16.msra.mxu0 %v308
  %384 = vmatpush.bf16.msra.mxu0 %v307
  %385 = vmatmul.bf16.gmra.mxu0 %v139
  %v386 = vpop.f32.mrf.mxu0
  %v387 = vadd.f32 %v368, %v386
  %v388 = vpop.f32.mrf.mxu0
  %v389 = vadd.f32 %v370, %v388
  %390 = vmatmul.bf16.gmra.mxu0 %v142
  %v391 = vpop.f32.mrf.mxu0
  %v392 = vadd.f32 %v373, %v391
  %v393 = vpop.f32.mrf.mxu0
  %v394 = vadd.f32 %v375, %v393
  %395 = vdwg.mxu0
  %v396 = vmax.f32 %v387, 0.0
  %v397 = vmax.f32 %v389, 0.0
  %v398 = vmax.f32 %v392, 0.0
  %v399 = vmax.f32 %v394, 0.0
  %vm400 = vcmp.ge.s32.totalorder %v75, 2
  %vm401 = vcmp.ge.s32.totalorder %v76, 2
  %vm402 = vcmp.ge.s32.totalorder %v77, 2
  %vm403 = vcmp.ge.s32.totalorder %v78, 2
  %v404 = vsel %vm400, 1, 0
  %v405 = vsel %vm401, 1, 0
  %v406 = vsel %vm402, 1, 0
  %v407 = vsel %vm403, 1, 0
  %v408 = vcvt.s32.f32 %v404
  %v409 = vcvt.s32.f32 %v405
  %v410 = vcvt.s32.f32 %v406
  %v411 = vcvt.s32.f32 %v407
  %vm412 = vcmp.lt.s32.totalorder %v75, 14
  %vm413 = vcmp.lt.s32.totalorder %v76, 14
  %vm414 = vcmp.lt.s32.totalorder %v77, 14
  %vm415 = vcmp.lt.s32.totalorder %v78, 14
  %v416 = vsel %vm412, 1, 0
  %v417 = vsel %vm413, 1, 0
  %v418 = vsel %vm414, 1, 0
  %v419 = vsel %vm415, 1, 0
  %v420 = vcvt.s32.f32 %v416
  %v421 = vcvt.s32.f32 %v417
  %v422 = vcvt.s32.f32 %v418
  %v423 = vcvt.s32.f32 %v419
  %v424 = vrot.slane %v396, 6
  %v425 = vrot.slane %v397, 6
  %v426 = vrot.slane %v398, 6
  %v427 = vrot.slane %v399, 6
  %vm428 = vcmp.lt.s32.totalorder %v27, 2
  %v429 = vsel %vm428, %v426, %v427
  %v430 = vsel %vm428, %v425, %v426
  %v431 = vsel %vm428, %v424, %v425
  %v432 = vsel %vm428, %v427, %v424
  %v433 = vmul.f32 %v432, %v408
  %v434 = vmul.f32 %v431, %v409
  %v435 = vmul.f32 %v430, %v410
  %v436 = vmul.f32 %v429, %v411
  %v437 = vrot.slane %v396, 2
  %v438 = vrot.slane %v397, 2
  %v439 = vrot.slane %v398, 2
  %v440 = vrot.slane %v399, 2
  %vm441 = vcmp.lt.s32.totalorder %v27, 6
  %v442 = vsel %vm441, %v439, %v440
  %v443 = vsel %vm441, %v438, %v439
  %v444 = vsel %vm441, %v437, %v438
  %v445 = vsel %vm441, %v440, %v437
  %v446 = vmul.f32 %v444, %v420
  %v447 = vmul.f32 %v443, %v421
  %v448 = vmul.f32 %v442, %v422
  %v449 = vmul.f32 %v445, %v423
  %v450 = vpack.c.bf16 %v434, %v433
  %v451 = vpack.c.bf16 %v397, %v396
  %v452 = vpack.c.bf16 %v447, %v446
  %v453 = vpack.c.bf16 %v436, %v435
  %v454 = vpack.c.bf16 %v399, %v398
  %v455 = vpack.c.bf16 %v449, %v448
  %v456 = vld [vmem:[%s3] sm:$0xf]
  %v457 = vld [vmem:[%s3 + $0x4] sm:$0xf]
  %v458 = vld [vmem:[%s3 + $0x8] sm:$0xf]
  %v459 = vld [vmem:[%s3 + $0xc] sm:$0xf]
  %v460 = vld [vmem:[%s3 + $0x10] sm:$0xf]
  %v461 = vld [vmem:[%s3 + $0x14] sm:$0xf]
  %v462 = vld [vmem:[%s3 + $0x18] sm:$0xf]
  %v463 = vld [vmem:[%s3 + $0x1c] sm:$0xf]
  %v464 = vld [vmem:[%s3 + $0x20] sm:$0xf]
  %v465 = vld [vmem:[%s3 + $0x24] sm:$0xf]
  %v466 = vld [vmem:[%s3 + $0x28] sm:$0xf]
  %v467 = vld [vmem:[%s3 + $0x2c] sm:$0xf]
  %v468 = vld [vmem:[%s3 + $0x30] sm:$0xf]
  %v469 = vld [vmem:[%s3 + $0x34] sm:$0xf]
  %v470 = vld [vmem:[%s3 + $0x38] sm:$0xf]
  %v471 = vld [vmem:[%s3 + $0x3c] sm:$0xf]
  %v472 = vld [vmem:[%s3 + $0x40] sm:$0xf]
  %v473 = vld [vmem:[%s3 + $0x44] sm:$0xf]
  %v474 = vld [vmem:[%s3 + $0x48] sm:$0xf]
  %v475 = vld [vmem:[%s3 + $0x4c] sm:$0xf]
  %v476 = vld [vmem:[%s3 + $0x50] sm:$0xf]
  %v477 = vld [vmem:[%s3 + $0x54] sm:$0xf]
  %v478 = vld [vmem:[%s3 + $0x58] sm:$0xf]
  %v479 = vld [vmem:[%s3 + $0x5c] sm:$0xf]
  %v480 = vld [vmem:[%s3 + $0x60] sm:$0xf]
  %v481 = vld [vmem:[%s3 + $0x64] sm:$0xf]
  %v482 = vld [vmem:[%s3 + $0x68] sm:$0xf]
  %v483 = vld [vmem:[%s3 + $0x6c] sm:$0xf]
  %v484 = vld [vmem:[%s3 + $0x70] sm:$0xf]
  %v485 = vld [vmem:[%s3 + $0x74] sm:$0xf]
  %v486 = vld [vmem:[%s3 + $0x78] sm:$0xf]
  %v487 = vld [vmem:[%s3 + $0x7c] sm:$0xf]
  %v488 = vld [vmem:[%s3 + $0x80] sm:$0xf]
  %v489 = vld [vmem:[%s3 + $0x84] sm:$0xf]
  %v490 = vld [vmem:[%s3 + $0x88] sm:$0xf]
  %v491 = vld [vmem:[%s3 + $0x8c] sm:$0xf]
  %v492 = vld [vmem:[%s3 + $0x90] sm:$0xf]
  %v493 = vld [vmem:[%s3 + $0x94] sm:$0xf]
  %v494 = vld [vmem:[%s3 + $0x98] sm:$0xf]
  %v495 = vld [vmem:[%s3 + $0x9c] sm:$0xf]
  %v496 = vld [vmem:[%s3 + $0xa0] sm:$0xf]
  %v497 = vld [vmem:[%s3 + $0xa4] sm:$0xf]
  %v498 = vld [vmem:[%s3 + $0xa8] sm:$0xf]
  %v499 = vld [vmem:[%s3 + $0xac] sm:$0xf]
  %v500 = vld [vmem:[%s3 + $0xb0] sm:$0xf]
  %v501 = vld [vmem:[%s3 + $0xb4] sm:$0xf]
  %v502 = vld [vmem:[%s3 + $0xb8] sm:$0xf]
  %v503 = vld [vmem:[%s3 + $0xbc] sm:$0xf]
  %v504 = vld [vmem:[%s4] sm:$0x1]
  %v506 = vperm.slane %v504, 0
  %v556 = vunpack.c.l.b16 %v456
  %v557 = vunpack.c.l.b16 %v457
  %v558 = vunpack.c.l.b16 %v458
  %v559 = vunpack.c.l.b16 %v459
  %v560 = vunpack.c.l.b16 %v460
  %v561 = vunpack.c.l.b16 %v461
  %v562 = vunpack.c.l.b16 %v462
  %v563 = vunpack.c.l.b16 %v463
  %v564 = vunpack.c.l.b16 %v464
  %v565 = vunpack.c.l.b16 %v465
  %v566 = vunpack.c.l.b16 %v466
  %v567 = vunpack.c.l.b16 %v467
  %v568 = vunpack.c.l.b16 %v468
  %v569 = vunpack.c.l.b16 %v469
  %v570 = vunpack.c.l.b16 %v470
  %v571 = vunpack.c.l.b16 %v471
  %v572 = vunpack.c.l.b16 %v472
  %v573 = vunpack.c.l.b16 %v473
  %v574 = vunpack.c.l.b16 %v474
  %v575 = vunpack.c.l.b16 %v475
  %v576 = vunpack.c.l.b16 %v476
  %v577 = vunpack.c.l.b16 %v477
  %v578 = vunpack.c.l.b16 %v478
  %v579 = vunpack.c.l.b16 %v479
  %v580 = vunpack.c.l.b16 %v480
  %v581 = vunpack.c.l.b16 %v481
  %v582 = vunpack.c.l.b16 %v482
  %v583 = vunpack.c.l.b16 %v483
  %v584 = vunpack.c.l.b16 %v484
  %v585 = vunpack.c.l.b16 %v485
  %v586 = vunpack.c.l.b16 %v486
  %v587 = vunpack.c.l.b16 %v487
  %v588 = vunpack.c.l.b16 %v488
  %v589 = vunpack.c.l.b16 %v489
  %v590 = vunpack.c.l.b16 %v490
  %v591 = vunpack.c.l.b16 %v491
  %v592 = vunpack.c.l.b16 %v492
  %v593 = vunpack.c.l.b16 %v493
  %v594 = vunpack.c.l.b16 %v494
  %v595 = vunpack.c.l.b16 %v495
  %v596 = vunpack.c.l.b16 %v496
  %v597 = vunpack.c.l.b16 %v497
  %v598 = vunpack.c.l.b16 %v498
  %v599 = vunpack.c.l.b16 %v499
  %v600 = vunpack.c.l.b16 %v500
  %v601 = vunpack.c.l.b16 %v501
  %v602 = vunpack.c.l.b16 %v502
  %v603 = vunpack.c.l.b16 %v503
  %v604 = vpack.c.b16 %v557, %v556
  %v605 = vpack.c.b16 %v559, %v558
  %v606 = vpack.c.b16 %v561, %v560
  %v607 = vpack.c.b16 %v563, %v562
  %v608 = vpack.c.b16 %v565, %v564
  %v609 = vpack.c.b16 %v567, %v566
  %v610 = vpack.c.b16 %v569, %v568
  %v611 = vpack.c.b16 %v571, %v570
  %v612 = vpack.c.b16 %v573, %v572
  %v613 = vpack.c.b16 %v575, %v574
  %v614 = vpack.c.b16 %v577, %v576
  %v615 = vpack.c.b16 %v579, %v578
  %v616 = vpack.c.b16 %v581, %v580
  %v617 = vpack.c.b16 %v583, %v582
  %v618 = vpack.c.b16 %v585, %v584
  %v619 = vpack.c.b16 %v587, %v586
  %v620 = vpack.c.b16 %v589, %v588
  %v621 = vpack.c.b16 %v591, %v590
  %v622 = vpack.c.b16 %v593, %v592
  %v623 = vpack.c.b16 %v595, %v594
  %v624 = vpack.c.b16 %v597, %v596
  %v625 = vpack.c.b16 %v599, %v598
  %v626 = vpack.c.b16 %v601, %v600
  %v627 = vpack.c.b16 %v603, %v602
  %652 = vmatpush.bf16.msra.mxu0 %v611
  %653 = vmatpush.bf16.msra.mxu0 %v610
  %654 = vmatpush.bf16.msra.mxu0 %v609
  %655 = vmatpush.bf16.msra.mxu0 %v608
  %656 = vmatpush.bf16.msra.mxu0 %v607
  %657 = vmatpush.bf16.msra.mxu0 %v606
  %658 = vmatpush.bf16.msra.mxu0 %v605
  %659 = vmatpush.bf16.msra.mxu0 %v604
  %660 = vmatmul.bf16.gmra.mxu0 %v450
  %v661 = vpop.f32.mrf.mxu0
  %v662 = vadd.f32 %v506, %v661
  %v663 = vpop.f32.mrf.mxu0
  %v664 = vadd.f32 %v506, %v663
  %665 = vmatmul.bf16.gmra.mxu0 %v453
  %v666 = vpop.f32.mrf.mxu0
  %v667 = vadd.f32 %v506, %v666
  %v668 = vpop.f32.mrf.mxu0
  %v669 = vadd.f32 %v506, %v668
  %670 = vdwg.mxu0
  %671 = vmatpush.bf16.msra.mxu0 %v619
  %672 = vmatpush.bf16.msra.mxu0 %v618
  %673 = vmatpush.bf16.msra.mxu0 %v617
  %674 = vmatpush.bf16.msra.mxu0 %v616
  %675 = vmatpush.bf16.msra.mxu0 %v615
  %676 = vmatpush.bf16.msra.mxu0 %v614
  %677 = vmatpush.bf16.msra.mxu0 %v613
  %678 = vmatpush.bf16.msra.mxu0 %v612
  %679 = vmatmul.bf16.gmra.mxu0 %v451
  %v680 = vpop.f32.mrf.mxu0
  %v681 = vadd.f32 %v662, %v680
  %v682 = vpop.f32.mrf.mxu0
  %v683 = vadd.f32 %v664, %v682
  %684 = vmatmul.bf16.gmra.mxu0 %v454
  %v685 = vpop.f32.mrf.mxu0
  %v686 = vadd.f32 %v667, %v685
  %v687 = vpop.f32.mrf.mxu0
  %v688 = vadd.f32 %v669, %v687
  %689 = vdwg.mxu0
  %690 = vmatpush.bf16.msra.mxu0 %v627
  %691 = vmatpush.bf16.msra.mxu0 %v626
  %692 = vmatpush.bf16.msra.mxu0 %v625
  %693 = vmatpush.bf16.msra.mxu0 %v624
  %694 = vmatpush.bf16.msra.mxu0 %v623
  %695 = vmatpush.bf16.msra.mxu0 %v622
  %696 = vmatpush.bf16.msra.mxu0 %v621
  %697 = vmatpush.bf16.msra.mxu0 %v620
  %698 = vmatmul.bf16.gmra.mxu0 %v452
  %v699 = vpop.f32.mrf.mxu0
  %v700 = vadd.f32 %v681, %v699
  %v701 = vpop.f32.mrf.mxu0
  %v702 = vadd.f32 %v683, %v701
  %703 = vmatmul.bf16.gmra.mxu0 %v455
  %v704 = vpop.f32.mrf.mxu0
  %v705 = vadd.f32 %v686, %v704
  %v706 = vpop.f32.mrf.mxu0
  %v707 = vadd.f32 %v688, %v706
  %708 = vdwg.mxu0
  %v709 = vmax.f32 %v700, 0.0
  %v710 = vmax.f32 %v702, 0.0
  %v711 = vmax.f32 %v705, 0.0
  %v712 = vmax.f32 %v707, 0.0
  %vm713 = vcmp.ge.s32.totalorder %v75, 4
  %vm714 = vcmp.ge.s32.totalorder %v76, 4
  %vm715 = vcmp.ge.s32.totalorder %v77, 4
  %vm716 = vcmp.ge.s32.totalorder %v78, 4
  %v717 = vsel %vm713, 1, 0
  %v718 = vsel %vm714, 1, 0
  %v719 = vsel %vm715, 1, 0
  %v720 = vsel %vm716, 1, 0
  %v721 = vcvt.s32.f32 %v717
  %v722 = vcvt.s32.f32 %v718
  %v723 = vcvt.s32.f32 %v719
  %v724 = vcvt.s32.f32 %v720
  %vm725 = vcmp.lt.s32.totalorder %v75, 12
  %vm726 = vcmp.lt.s32.totalorder %v76, 12
  %vm727 = vcmp.lt.s32.totalorder %v77, 12
  %vm728 = vcmp.lt.s32.totalorder %v78, 12
  %v729 = vsel %vm725, 1, 0
  %v730 = vsel %vm726, 1, 0
  %v731 = vsel %vm727, 1, 0
  %v732 = vsel %vm728, 1, 0
  %v733 = vcvt.s32.f32 %v729
  %v734 = vcvt.s32.f32 %v730
  %v735 = vcvt.s32.f32 %v731
  %v736 = vcvt.s32.f32 %v732
  %v737 = vrot.slane %v709, 4
  %v738 = vrot.slane %v710, 4
  %v739 = vrot.slane %v711, 4
  %v740 = vrot.slane %v712, 4
  %vm741 = vcmp.lt.s32.totalorder %v27, 4
  %v742 = vsel %vm741, %v739, %v740
  %v743 = vsel %vm741, %v738, %v739
  %v744 = vsel %vm741, %v737, %v738
  %v745 = vsel %vm741, %v740, %v737
  %v746 = vmul.f32 %v745, %v721
  %v747 = vmul.f32 %v744, %v722
  %v748 = vmul.f32 %v743, %v723
  %v749 = vmul.f32 %v742, %v724
  %v750 = vmul.f32 %v744, %v733
  %v751 = vmul.f32 %v743, %v734
  %v752 = vmul.f32 %v742, %v735
  %v753 = vmul.f32 %v745, %v736
  %v754 = vpack.c.bf16 %v747, %v746
  %v755 = vpack.c.bf16 %v710, %v709
  %v756 = vpack.c.bf16 %v751, %v750
  %v757 = vpack.c.bf16 %v749, %v748
  %v758 = vpack.c.bf16 %v712, %v711
  %v759 = vpack.c.bf16 %v753, %v752
  %v760 = vld [vmem:[%s5] sm:$0xf]
  %v761 = vld [vmem:[%s5 + $0x4] sm:$0xf]
  %v762 = vld [vmem:[%s5 + $0x8] sm:$0xf]
  %v763 = vld [vmem:[%s5 + $0xc] sm:$0xf]
  %v764 = vld [vmem:[%s5 + $0x10] sm:$0xf]
  %v765 = vld [vmem:[%s5 + $0x14] sm:$0xf]
  %v766 = vld [vmem:[%s5 + $0x18] sm:$0xf]
  %v767 = vld [vmem:[%s5 + $0x1c] sm:$0xf]
  %v768 = vld [vmem:[%s5 + $0x20] sm:$0xf]
  %v769 = vld [vmem:[%s5 + $0x24] sm:$0xf]
  %v770 = vld [vmem:[%s5 + $0x28] sm:$0xf]
  %v771 = vld [vmem:[%s5 + $0x2c] sm:$0xf]
  %v772 = vld [vmem:[%s5 + $0x30] sm:$0xf]
  %v773 = vld [vmem:[%s5 + $0x34] sm:$0xf]
  %v774 = vld [vmem:[%s5 + $0x38] sm:$0xf]
  %v775 = vld [vmem:[%s5 + $0x3c] sm:$0xf]
  %v776 = vld [vmem:[%s5 + $0x40] sm:$0xf]
  %v777 = vld [vmem:[%s5 + $0x44] sm:$0xf]
  %v778 = vld [vmem:[%s5 + $0x48] sm:$0xf]
  %v779 = vld [vmem:[%s5 + $0x4c] sm:$0xf]
  %v780 = vld [vmem:[%s5 + $0x50] sm:$0xf]
  %v781 = vld [vmem:[%s5 + $0x54] sm:$0xf]
  %v782 = vld [vmem:[%s5 + $0x58] sm:$0xf]
  %v783 = vld [vmem:[%s5 + $0x5c] sm:$0xf]
  %v784 = vld [vmem:[%s5 + $0x60] sm:$0xf]
  %v785 = vld [vmem:[%s5 + $0x64] sm:$0xf]
  %v786 = vld [vmem:[%s5 + $0x68] sm:$0xf]
  %v787 = vld [vmem:[%s5 + $0x6c] sm:$0xf]
  %v788 = vld [vmem:[%s5 + $0x70] sm:$0xf]
  %v789 = vld [vmem:[%s5 + $0x74] sm:$0xf]
  %v790 = vld [vmem:[%s5 + $0x78] sm:$0xf]
  %v791 = vld [vmem:[%s5 + $0x7c] sm:$0xf]
  %v792 = vld [vmem:[%s5 + $0x80] sm:$0xf]
  %v793 = vld [vmem:[%s5 + $0x84] sm:$0xf]
  %v794 = vld [vmem:[%s5 + $0x88] sm:$0xf]
  %v795 = vld [vmem:[%s5 + $0x8c] sm:$0xf]
  %v796 = vld [vmem:[%s5 + $0x90] sm:$0xf]
  %v797 = vld [vmem:[%s5 + $0x94] sm:$0xf]
  %v798 = vld [vmem:[%s5 + $0x98] sm:$0xf]
  %v799 = vld [vmem:[%s5 + $0x9c] sm:$0xf]
  %v800 = vld [vmem:[%s5 + $0xa0] sm:$0xf]
  %v801 = vld [vmem:[%s5 + $0xa4] sm:$0xf]
  %v802 = vld [vmem:[%s5 + $0xa8] sm:$0xf]
  %v803 = vld [vmem:[%s5 + $0xac] sm:$0xf]
  %v804 = vld [vmem:[%s5 + $0xb0] sm:$0xf]
  %v805 = vld [vmem:[%s5 + $0xb4] sm:$0xf]
  %v806 = vld [vmem:[%s5 + $0xb8] sm:$0xf]
  %v807 = vld [vmem:[%s5 + $0xbc] sm:$0xf]
  %v808 = vld [vmem:[%s6] sm:$0x1]
  %v810 = vperm.slane %v808, 0
  %v860 = vunpack.c.l.b16 %v760
  %v861 = vunpack.c.l.b16 %v761
  %v862 = vunpack.c.l.b16 %v762
  %v863 = vunpack.c.l.b16 %v763
  %v864 = vunpack.c.l.b16 %v764
  %v865 = vunpack.c.l.b16 %v765
  %v866 = vunpack.c.l.b16 %v766
  %v867 = vunpack.c.l.b16 %v767
  %v868 = vunpack.c.l.b16 %v768
  %v869 = vunpack.c.l.b16 %v769
  %v870 = vunpack.c.l.b16 %v770
  %v871 = vunpack.c.l.b16 %v771
  %v872 = vunpack.c.l.b16 %v772
  %v873 = vunpack.c.l.b16 %v773
  %v874 = vunpack.c.l.b16 %v774
  %v875 = vunpack.c.l.b16 %v775
  %v876 = vunpack.c.l.b16 %v776
  %v877 = vunpack.c.l.b16 %v777
  %v878 = vunpack.c.l.b16 %v778
  %v879 = vunpack.c.l.b16 %v779
  %v880 = vunpack.c.l.b16 %v780
  %v881 = vunpack.c.l.b16 %v781
  %v882 = vunpack.c.l.b16 %v782
  %v883 = vunpack.c.l.b16 %v783
  %v884 = vunpack.c.l.b16 %v784
  %v885 = vunpack.c.l.b16 %v785
  %v886 = vunpack.c.l.b16 %v786
  %v887 = vunpack.c.l.b16 %v787
  %v888 = vunpack.c.l.b16 %v788
  %v889 = vunpack.c.l.b16 %v789
  %v890 = vunpack.c.l.b16 %v790
  %v891 = vunpack.c.l.b16 %v791
  %v892 = vunpack.c.l.b16 %v792
  %v893 = vunpack.c.l.b16 %v793
  %v894 = vunpack.c.l.b16 %v794
  %v895 = vunpack.c.l.b16 %v795
  %v896 = vunpack.c.l.b16 %v796
  %v897 = vunpack.c.l.b16 %v797
  %v898 = vunpack.c.l.b16 %v798
  %v899 = vunpack.c.l.b16 %v799
  %v900 = vunpack.c.l.b16 %v800
  %v901 = vunpack.c.l.b16 %v801
  %v902 = vunpack.c.l.b16 %v802
  %v903 = vunpack.c.l.b16 %v803
  %v904 = vunpack.c.l.b16 %v804
  %v905 = vunpack.c.l.b16 %v805
  %v906 = vunpack.c.l.b16 %v806
  %v907 = vunpack.c.l.b16 %v807
  %v908 = vpack.c.b16 %v861, %v860
  %v909 = vpack.c.b16 %v863, %v862
  %v910 = vpack.c.b16 %v865, %v864
  %v911 = vpack.c.b16 %v867, %v866
  %v912 = vpack.c.b16 %v869, %v868
  %v913 = vpack.c.b16 %v871, %v870
  %v914 = vpack.c.b16 %v873, %v872
  %v915 = vpack.c.b16 %v875, %v874
  %v916 = vpack.c.b16 %v877, %v876
  %v917 = vpack.c.b16 %v879, %v878
  %v918 = vpack.c.b16 %v881, %v880
  %v919 = vpack.c.b16 %v883, %v882
  %v920 = vpack.c.b16 %v885, %v884
  %v921 = vpack.c.b16 %v887, %v886
  %v922 = vpack.c.b16 %v889, %v888
  %v923 = vpack.c.b16 %v891, %v890
  %v924 = vpack.c.b16 %v893, %v892
  %v925 = vpack.c.b16 %v895, %v894
  %v926 = vpack.c.b16 %v897, %v896
  %v927 = vpack.c.b16 %v899, %v898
  %v928 = vpack.c.b16 %v901, %v900
  %v929 = vpack.c.b16 %v903, %v902
  %v930 = vpack.c.b16 %v905, %v904
  %v931 = vpack.c.b16 %v907, %v906
  %956 = vmatpush.bf16.msra.mxu0 %v915
  %957 = vmatpush.bf16.msra.mxu0 %v914
  %958 = vmatpush.bf16.msra.mxu0 %v913
  %959 = vmatpush.bf16.msra.mxu0 %v912
  %960 = vmatpush.bf16.msra.mxu0 %v911
  %961 = vmatpush.bf16.msra.mxu0 %v910
  %962 = vmatpush.bf16.msra.mxu0 %v909
  %963 = vmatpush.bf16.msra.mxu0 %v908
  %964 = vmatmul.bf16.gmra.mxu0 %v754
  %v965 = vpop.f32.mrf.mxu0
  %v966 = vadd.f32 %v810, %v965
  %v967 = vpop.f32.mrf.mxu0
  %v968 = vadd.f32 %v810, %v967
  %969 = vmatmul.bf16.gmra.mxu0 %v757
  %v970 = vpop.f32.mrf.mxu0
  %v971 = vadd.f32 %v810, %v970
  %v972 = vpop.f32.mrf.mxu0
  %v973 = vadd.f32 %v810, %v972
  %974 = vdwg.mxu0
  %975 = vmatpush.bf16.msra.mxu0 %v923
  %976 = vmatpush.bf16.msra.mxu0 %v922
  %977 = vmatpush.bf16.msra.mxu0 %v921
  %978 = vmatpush.bf16.msra.mxu0 %v920
  %979 = vmatpush.bf16.msra.mxu0 %v919
  %980 = vmatpush.bf16.msra.mxu0 %v918
  %981 = vmatpush.bf16.msra.mxu0 %v917
  %982 = vmatpush.bf16.msra.mxu0 %v916
  %983 = vmatmul.bf16.gmra.mxu0 %v755
  %v984 = vpop.f32.mrf.mxu0
  %v985 = vadd.f32 %v966, %v984
  %v986 = vpop.f32.mrf.mxu0
  %v987 = vadd.f32 %v968, %v986
  %988 = vmatmul.bf16.gmra.mxu0 %v758
  %v989 = vpop.f32.mrf.mxu0
  %v990 = vadd.f32 %v971, %v989
  %v991 = vpop.f32.mrf.mxu0
  %v992 = vadd.f32 %v973, %v991
  %993 = vdwg.mxu0
  %994 = vmatpush.bf16.msra.mxu0 %v931
  %995 = vmatpush.bf16.msra.mxu0 %v930
  %996 = vmatpush.bf16.msra.mxu0 %v929
  %997 = vmatpush.bf16.msra.mxu0 %v928
  %998 = vmatpush.bf16.msra.mxu0 %v927
  %999 = vmatpush.bf16.msra.mxu0 %v926
  %1000 = vmatpush.bf16.msra.mxu0 %v925
  %1001 = vmatpush.bf16.msra.mxu0 %v924
  %1002 = vmatmul.bf16.gmra.mxu0 %v756
  %v1003 = vpop.f32.mrf.mxu0
  %v1004 = vadd.f32 %v985, %v1003
  %v1005 = vpop.f32.mrf.mxu0
  %v1006 = vadd.f32 %v987, %v1005
  %1007 = vmatmul.bf16.gmra.mxu0 %v759
  %v1008 = vpop.f32.mrf.mxu0
  %v1009 = vadd.f32 %v990, %v1008
  %v1010 = vpop.f32.mrf.mxu0
  %v1011 = vadd.f32 %v992, %v1010
  %1012 = vdwg.mxu0
  %1013 = vst [vmem:[%s7] sm:$0xff] %v1004
  %1014 = vst [vmem:[%s7 + $0x8] sm:$0xff] %v1006
  %1015 = vst [vmem:[%s7 + $0x10] sm:$0xff] %v1009
  %1016 = vst [vmem:[%s7 + $0x18] sm:$0xff] %v1011
  // Predicated region
  $region30: #{local_block.1} parent=0 // pred_check
    _
  $region31: #{local_block.1} parent=0 // pred_check_branch
    %1018 = sbr.rel (0) target = $region33
  $region32: #{local_block.1} parent=0 // pred_region
    _
  $region33: #{local_block.1} parent=0 // pred_fallthru
    _
  // Predicated region
  $region34: #{local_block.1} parent=0 // pred_check
    _
  $region35: #{local_block.1} parent=0 // pred_check_branch
    %1020 = sbr.rel (0) target = $region37
  $region36: #{local_block.1} parent=0 // pred_region
    _
  $region37: #{local_block.1} parent=0 // pred_fallthru
    _

</llo_original>
